<compile_context>
chip_gen: v7x
topology: tpu7x:2x2x1
jax: 0.10.0
libtpu: 0.0.40
codegen_flags: <defaults>
</compile_context>

<pallas_src>
import functools
import math

import jax
import jax.numpy as jnp
from jax.experimental import pallas as pl
from jax.experimental.pallas import tpu as pltpu


_MIN_STEPS = 8              # keep >= this many grid steps for mid/large inputs
_PIPELINE_THRESH_ROWS = 512 # only force multi-step pipelining above this many rows
_MAX_FOLDED_LANE = 512      # cap folded lane width (keeps block-diag matrix small)


def _vmem_budgets():
    """(data_budget_bytes, vmem_limit_bytes), generation aware."""
    try:
        cap = pltpu.get_tpu_info().vmem_capacity_bytes
    except Exception:
        cap = 64 << 20
    if cap >= (100 << 20):          # v5e / v6e: 128 MiB physical VMEM
        return 48 << 20, 96 << 20
    return 24 << 20, 48 << 20       # v7x: 64 MiB physical VMEM


def _round_down(x, m):
    return max(m, (x // m) * m)


def _round_up(x, m):
    return ((x + m - 1) // m) * m


def _add_layernorm_kernel(a_ref, b_ref, g_ref, beta_ref, o_ref, *, eps):
    """One token per row; LayerNorm over the whole lane (last) axis.

    Two-pass variance (mean first, then E[(x-mean)^2]) avoids the cancellation
    issue of E[x^2] - mean^2 when |mean| >> std.
    """
    x = a_ref[...].astype(jnp.float32) + b_ref[...].astype(jnp.float32)
    mean = jnp.mean(x, axis=-1, keepdims=True)
    c = x - mean
    var = jnp.mean(c * c, axis=-1, keepdims=True)
    inv = jax.lax.rsqrt(var + eps)
    y = c * inv * g_ref[...].astype(jnp.float32) + beta_ref[...].astype(jnp.float32)
    o_ref[...] = y.astype(o_ref.dtype)


def _add_layernorm_folded_kernel(a_ref, b_ref, g_ref, beta_ref, bd_ref, o_ref, *, eps):
    """k tokens folded per lane-dense row (lane = k*D, a multiple of 128).

    Per-token mean / variance are computed on the MXU by multiplying with a
    constant block-diagonal (lane x lane) matrix holding 1/D in each DxD
    diagonal block; the matmul also broadcasts the statistic back onto its
    segment for free.  Two-pass variance for numerical robustness.
    """
    x = a_ref[...].astype(jnp.float32) + b_ref[...].astype(jnp.float32)
    bd = bd_ref[...]
    mean = jnp.dot(x, bd, preferred_element_type=jnp.float32)
    c = x - mean
    var = jnp.dot(c * c, bd, preferred_element_type=jnp.float32)
    inv = jax.lax.rsqrt(var + eps)
    y = c * inv * g_ref[...].astype(jnp.float32) + beta_ref[...].astype(jnp.float32)
    o_ref[...] = y.astype(o_ref.dtype)


def cross_modal_encoder_forward(a, b, gamma, beta, *, fusion_type="sum",
                                eps=1e-5, block_rows=None):
    """Pallas implementation of CrossModalEncoder.forward for fusion_type in
    ('sum', 'mean'), enc_cfg=None (no attention encoder)."""
    assert fusion_type in ("sum", "mean"), \
        "concat path requires self.mapping, which is None in the reference module"
    assert a.shape == b.shape
    B, S, D = a.shape
    N = B * S

    # 'mean' scaling folded into eps: LayerNorm(s*x, eps) == LayerNorm(x, eps/s^2)
    # (exact identity for s > 0; here s = 0.5) -> saves a full-tile multiply.
    scale = 0.5 if fusion_type == "mean" else 1.0
    eps_eff = float(eps) / (scale * scale)

    itemsize = jnp.dtype(a.dtype).itemsize
    sub = max(8, 32 // itemsize)        # sublane packing: 8 f32, 16 bf16, 32 int8/fp8

    # ---- lane-dense layout: fold k tokens per row so lane = k*D is a multiple of 128.
    k = 1
    if D < 128:
        lane_try = math.lcm(D, 128)
        if lane_try <= _MAX_FOLDED_LANE:
            k = lane_try // D
        # TODO(synk): awkward D (lcm(D,128) > _MAX_FOLDED_LANE) falls back to a
        # narrow, masked-store lane layout.
    lane = k * D

    a_flat = a.reshape(N, D)
    b_flat = b.reshape(N, D)
    pad = (-N) % k
    if pad:
        zpad = jnp.zeros((pad, D), dtype=a.dtype)
        a_flat = jnp.concatenate([a_flat, zpad], axis=0)
        b_flat = jnp.concatenate([b_flat, zpad], axis=0)
    n_tok = N + pad
    n_rows = n_tok // k

    a2 = a_flat.reshape(n_rows, lane)
    b2 = b_flat.reshape(n_rows, lane)
    g2 = jnp.tile(gamma.reshape(1, D), (1, k))
    beta2 = jnp.tile(beta.reshape(1, D), (1, k))

    # ---- row tile: generation-aware VMEM budget; account for pipelined streams
    # (3 arrays x 2 buffers) plus ~3 block-sized f32 intermediates.
    data_budget, vmem_limit = _vmem_budgets()
    if block_rows is None:
        per_row_bytes = 6 * lane * itemsize + 3 * lane * 4
        tm = _round_down(int(data_budget // per_row_bytes), sub)
        if n_rows >= _PIPELINE_THRESH_ROWS:
            # Keep >= _MIN_STEPS grid steps: preserves DMA/compute overlap and
            # lets the "parallel" axis shard across both v7x TensorCores.
            tm = min(tm, _round_down(n_rows // _MIN_STEPS, sub))
        else:
            tm = min(tm, _round_up(n_rows, sub))
    else:
        tm = max(sub, _round_up(int(block_rows), sub))
    tm = max(tm, sub)

    grid = (pl.cdiv(n_rows, tm),)       # partial tail tile -> masked writeback

    common_in_specs = [
        pl.BlockSpec((tm, lane), lambda i: (i, 0)),
        pl.BlockSpec((tm, lane), lambda i: (i, 0)),
        pl.BlockSpec((1, lane), lambda i: (0, 0)),
        pl.BlockSpec((1, lane), lambda i: (0, 0)),
    ]
    out_spec = pl.BlockSpec((tm, lane), lambda i: (i, 0))
    cparams = pltpu.CompilerParams(
        dimension_semantics=("parallel",),
        vmem_limit_bytes=vmem_limit)

    if k > 1:
        # Constant block-diagonal reduction matrix: 1/D inside each DxD block.
        seg = jnp.arange(lane, dtype=jnp.int32) // D
        bd = jnp.where(seg[:, None] == seg[None, :], 1.0 / D, 0.0).astype(jnp.float32)
        out2 = pl.pallas_call(
            functools.partial(_add_layernorm_folded_kernel, eps=eps_eff),
            out_shape=jax.ShapeDtypeStruct((n_rows, lane), a.dtype),
            grid=grid,
            in_specs=common_in_specs + [pl.BlockSpec((lane, lane), lambda i: (0, 0))],
            out_specs=out_spec,
            compiler_params=cparams,
        )(a2, b2, g2, beta2, bd)
    else:
        out2 = pl.pallas_call(
            functools.partial(_add_layernorm_kernel, eps=eps_eff),
            out_shape=jax.ShapeDtypeStruct((n_rows, lane), a.dtype),
            grid=grid,
            in_specs=common_in_specs,
            out_specs=out_spec,
            compiler_params=cparams,
        )(a2, b2, g2, beta2)

    out_flat = out2.reshape(n_tok, D)
    if pad:
        out_flat = out_flat[:N]
    return out_flat.reshape(B, S, D)


def _reference(a, b, gamma, beta, fusion_type="sum", eps=1e-5):
    x = (a + b) * (0.5 if fusion_type == "mean" else 1.0)
    mean = jnp.mean(x, axis=-1, keepdims=True)
    var = jnp.mean((x - mean) ** 2, axis=-1, keepdims=True)
    return (x - mean) / jnp.sqrt(var + eps) * gamma + beta


if __name__ == "__main__":
    key = jax.random.PRNGKey(0)
    ka, kb, kc, kd, ke, kf, kg, kh = jax.random.split(key, 8)

    # --- Test 1: module-implied small shapes (batch=2, seq=8, dims=32), 'sum'.
    #     D=32 < 128 exercises the folded (MXU block-diagonal) lane-dense path.
    B, S, D = 2, 8, 32
    a = jax.random.normal(ka, (B, S, D), dtype=jnp.float32)
    b = jax.random.normal(kb, (B, S, D), dtype=jnp.float32)
    gamma = jnp.ones((D,), dtype=jnp.float32)   # nn.LayerNorm default init
    beta = jnp.zeros((D,), dtype=jnp.float32)
    out = jax.block_until_ready(
        cross_modal_encoder_forward(a, b, gamma, beta, fusion_type="sum"))
    ref = _reference(a, b, gamma, beta, "sum")
    assert out.shape == (B, S, D)
    assert jnp.allclose(out, ref, atol=1e-5, rtol=1e-5), "sum/folded path mismatch"

    # --- Test 2: 'mean' fusion (eps-folded scale), lane-dense D=128,
    #     ragged rows (partial tail tile via explicit small block_rows).
    B2, S2, D2 = 2, 13, 128
    a2 = jax.random.normal(kc, (B2, S2, D2), dtype=jnp.float32)
    b2 = jax.random.normal(kd, (B2, S2, D2), dtype=jnp.float32)
    g2 = 1.0 + 0.1 * jax.random.normal(ke, (D2,), dtype=jnp.float32)
    bt2 = 0.1 * jax.random.normal(kf, (D2,), dtype=jnp.float32)
    out2 = jax.block_until_ready(
        cross_modal_encoder_forward(a2, b2, g2, bt2, fusion_type="mean", block_rows=8))
    ref2 = _reference(a2, b2, g2, bt2, "mean")
    assert out2.shape == (B2, S2, D2)
    assert jnp.allclose(out2, ref2, atol=1e-5, rtol=1e-5), "mean/partial-tile path mismatch"

    # --- Test 3: folded path with token-count padding (N % k != 0), 'mean'.
    B3, S3, D3 = 1, 7, 32
    a3 = jax.random.normal(kg, (B3, S3, D3), dtype=jnp.float32)
    b3 = jax.random.normal(kh, (B3, S3, D3), dtype=jnp.float32)
    g3 = jnp.ones((D3,), dtype=jnp.float32)
    bt3 = jnp.zeros((D3,), dtype=jnp.float32)
    out3 = jax.block_until_ready(
        cross_modal_encoder_forward(a3, b3, g3, bt3, fusion_type="mean"))
    ref3 = _reference(a3, b3, g3, bt3, "mean")
    assert out3.shape == (B3, S3, D3)
    assert jnp.allclose(out3, ref3, atol=1e-5, rtol=1e-5), "mean/padded-fold path mismatch"

    print("KERNEL_OK")
</pallas_src>

<mosaic_0001>
module attributes {stable_mosaic.version = 11 : i64} {
  func.func @_add_layernorm_folded_kernel(%arg0: i32, %arg1: memref<8x128xf32, #tpu.memory_space<vmem>>, %arg2: memref<8x128xf32, #tpu.memory_space<vmem>>, %arg3: memref<1x128xf32, #tpu.memory_space<vmem>>, %arg4: memref<1x128xf32, #tpu.memory_space<vmem>>, %arg5: memref<128x128xf32, #tpu.memory_space<vmem>>, %arg6: memref<8x128xf32, #tpu.memory_space<vmem>>) attributes {dimension_semantics = [#tpu.dimension_semantics<parallel>], iteration_bounds = array<i64: 1>, scalar_prefetch = 0 : i64, scratch_operands = 0 : i64, tpu.core_type = #tpu.core_type<tc>, window_params = [{transform_indices = @transform_0, window_bounds = array<i64: 8, 128>}, {transform_indices = @transform_1, window_bounds = array<i64: 8, 128>}, {pipeline_mode = #tpu.pipeline_mode<synchronous>, transform_indices = @transform_2, window_bounds = array<i64: 1, 128>}, {pipeline_mode = #tpu.pipeline_mode<synchronous>, transform_indices = @transform_3, window_bounds = array<i64: 1, 128>}, {pipeline_mode = #tpu.pipeline_mode<synchronous>, transform_indices = @transform_4, window_bounds = array<i64: 128, 128>}, {transform_indices = @transform_5, window_bounds = array<i64: 8, 128>}]} {
    %c0 = arith.constant 0 : index
    %c0_0 = arith.constant 0 : index
    %0 = vector.load %arg1[%c0, %c0_0] : memref<8x128xf32, #tpu.memory_space<vmem>>, vector<8x128xf32>
    %c0_1 = arith.constant 0 : index
    %c0_2 = arith.constant 0 : index
    %1 = vector.load %arg2[%c0_1, %c0_2] : memref<8x128xf32, #tpu.memory_space<vmem>>, vector<8x128xf32>
    %2 = arith.addf %0, %1 : vector<8x128xf32>
    %c0_3 = arith.constant 0 : index
    %c0_4 = arith.constant 0 : index
    %3 = vector.load %arg5[%c0_3, %c0_4] : memref<128x128xf32, #tpu.memory_space<vmem>>, vector<128x128xf32>
    %cst = arith.constant dense<0.000000e+00> : vector<8x128xf32>
    %4 = tpu.matmul %2, %3, %cst {dimension_numbers = #tpu.dot_dimension_numbers<[1], [0], [0], [1], [0, 0, 1, 1], [], []>} : vector<8x128xf32>, vector<128x128xf32>, vector<8x128xf32> -> vector<8x128xf32>
    %5 = arith.subf %2, %4 : vector<8x128xf32>
    %6 = arith.mulf %5, %5 : vector<8x128xf32>
    %cst_5 = arith.constant dense<0.000000e+00> : vector<8x128xf32>
    %7 = tpu.matmul %6, %3, %cst_5 {dimension_numbers = #tpu.dot_dimension_numbers<[1], [0], [0], [1], [0, 0, 1, 1], [], []>} : vector<8x128xf32>, vector<128x128xf32>, vector<8x128xf32> -> vector<8x128xf32>
    %cst_6 = arith.constant 9.99999974E-6 : f32
    %8 = vector.broadcast %cst_6 : f32 to vector<8x128xf32>
    %9 = arith.addf %7, %8 : vector<8x128xf32>
    %10 = math.rsqrt %9 : vector<8x128xf32>
    %11 = arith.mulf %5, %10 : vector<8x128xf32>
    %c0_7 = arith.constant 0 : index
    %c0_8 = arith.constant 0 : index
    %12 = vector.load %arg3[%c0_7, %c0_8] : memref<1x128xf32, #tpu.memory_space<vmem>>, vector<1x128xf32>
    %13 = vector.broadcast %12 : vector<1x128xf32> to vector<8x128xf32>
    %14 = arith.mulf %11, %13 : vector<8x128xf32>
    %c0_9 = arith.constant 0 : index
    %c0_10 = arith.constant 0 : index
    %15 = vector.load %arg4[%c0_9, %c0_10] : memref<1x128xf32, #tpu.memory_space<vmem>>, vector<1x128xf32>
    %16 = vector.broadcast %15 : vector<1x128xf32> to vector<8x128xf32>
    %17 = arith.addf %14, %16 : vector<8x128xf32>
    %c0_11 = arith.constant 0 : index
    %c0_12 = arith.constant 0 : index
    %18 = vector.load %arg6[%c0_11, %c0_12] : memref<8x128xf32, #tpu.memory_space<vmem>>, vector<8x128xf32>
    tpu.vector_store %arg6[%c0_11, %c0_12], %17 {strides = array<i32>} : memref<8x128xf32, #tpu.memory_space<vmem>>, vector<8x128xf32>,
    return
  }
  func.func @transform_0(%arg0: i32) -> (i32, i32) {
    %c0_i32 = arith.constant 0 : i32
    %c0_i32_0 = arith.constant 0 : i32
    return %arg0, %c0_i32 : i32, i32
  }
  func.func @transform_1(%arg0: i32) -> (i32, i32) {
    %c0_i32 = arith.constant 0 : i32
    %c0_i32_0 = arith.constant 0 : i32
    return %arg0, %c0_i32 : i32, i32
  }
  func.func @transform_2(%arg0: i32) -> (i32, i32) {
    %c0_i32 = arith.constant 0 : i32
    %c0_i32_0 = arith.constant 0 : i32
    %c0_i32_1 = arith.constant 0 : i32
    return %c0_i32, %c0_i32_0 : i32, i32
  }
  func.func @transform_3(%arg0: i32) -> (i32, i32) {
    %c0_i32 = arith.constant 0 : i32
    %c0_i32_0 = arith.constant 0 : i32
    %c0_i32_1 = arith.constant 0 : i32
    return %c0_i32, %c0_i32_0 : i32, i32
  }
  func.func @transform_4(%arg0: i32) -> (i32, i32) {
    %c0_i32 = arith.constant 0 : i32
    %c0_i32_0 = arith.constant 0 : i32
    %c0_i32_1 = arith.constant 0 : i32
    return %c0_i32, %c0_i32_0 : i32, i32
  }
  func.func @transform_5(%arg0: i32) -> (i32, i32) {
    %c0_i32 = arith.constant 0 : i32
    %c0_i32_0 = arith.constant 0 : i32
    return %arg0, %c0_i32 : i32, i32
  }
}

</mosaic_0001>

<llo_original>
// kernel: tpu_custom_call.1
$region0: #{tpu_custom_call.1}
  #allocation0 [shape = 'u32[]', space=smem, size = 0x4, offset = 0x4, fixed_abs, tag = 'smem constant byte address 0x4 - core index']
  #allocation1 [shape = 'u32[144,128]{1,0:T(1,128)}', space=vmem, size = 0x12000, scoped, tag = 'internal scratch']
  %s0 = inlined_call_operand.hbm [shape: f32[4,128], index: 0, kind: input, shape index: {}]
  %s1 = inlined_call_operand.hbm [shape: f32[4,128], index: 1, kind: input, shape index: {}]
  %s2 = inlined_call_operand.vmem [shape: f32[1,128], index: 2, kind: input, shape index: {}]
  %s3 = inlined_call_operand.vmem [shape: f32[1,128], index: 3, kind: input, shape index: {}]
  %s4 = inlined_call_operand.hbm [shape: f32[128,128], index: 4, kind: input, shape index: {}]
  %s5 = inlined_call_operand.hbm [shape: f32[4,128], index: 5, kind: output, shape index: {}]
  %s6 = sld [smem:[#allocation0]]
  $region42: #{tpu_custom_call.1} parent=0
    _
  %s8 = ssub.s32 1, %s6
  %s9 = scalar_select 0, %s8, %s6
  $region1: #{tpu_custom_call.1} parent=0
    #allocation2 [shape = 'u8[4096]{0}', space=vmem, size = 0x1000, scoped, tag = 'input window, operand 0, single buffered']
    #allocation3 [shape = 's32[1]{0}', space=sflag, size = 0x4, scoped, tag = 'scoped memory for tpu_custom_call.1']
    #allocation4 [shape = 's32[1]{0}', space=sflag, size = 0x4, scoped, tag = 'scoped memory for tpu_custom_call.1']
    #allocation5 [shape = 'u8[4096]{0}', space=vmem, size = 0x1000, scoped, tag = 'input window, operand 1, single buffered']
    #allocation6 [shape = 's32[1]{0}', space=sflag, size = 0x4, scoped, tag = 'scoped memory for tpu_custom_call.1']
    #allocation7 [shape = 'u8[65536]{0}', space=vmem, size = 0x10000, scoped, tag = 'input window, operand 4, single buffered']
    #allocation8 [shape = 'u8[4096]{0}', space=vmem, size = 0x1000, scoped, tag = 'output window, operand 0, single buffered']
    %10 = vsyncpa [#allocation3], 0
    %11 = vsyncpa [#allocation6], 0
    %12 = vsyncpa [#allocation4], 0
    // Predicated region
    $region2: #{tpu_custom_call.1} parent=1 // pred_check
      _
    $region3: #{tpu_custom_call.1} parent=1 // pred_check_branch
      %14 = sbr.rel (0) target = $region5
    $region4: #{tpu_custom_call.1} parent=1 // pred_region
      %s16 = ssub.s32 128, 64
      %17 = vsyncadd [#allocation3], %s16
      %s18 = sshll.u32 [#allocation2], 4
      %s19 = int_to_ptr.vmem [resolvable:$true] %s18
      %24 = dma.hbm_to_vmem [thread:$0]  %s0, 64, %s19, [#allocation3], 64, 64, 4
    $region5: #{tpu_custom_call.1} parent=1 // pred_fallthru
      _
    // Predicated region
    $region6: #{tpu_custom_call.1} parent=1 // pred_check
      _
    $region7: #{tpu_custom_call.1} parent=1 // pred_check_branch
      %26 = sbr.rel (0) target = $region9
    $region8: #{tpu_custom_call.1} parent=1 // pred_region
      %s28 = ssub.s32 128, 64
      %29 = vsyncadd [#allocation6], %s28
      %s30 = sshll.u32 [#allocation5], 4
      %s31 = int_to_ptr.vmem [resolvable:$true] %s30
      %36 = dma.hbm_to_vmem [thread:$0]  %s1, 64, %s31, [#allocation6], 64, 64, 4
    $region9: #{tpu_custom_call.1} parent=1 // pred_fallthru
      _
    // Predicated region
    $region10: #{tpu_custom_call.1} parent=1 // pred_check
      _
    $region11: #{tpu_custom_call.1} parent=1 // pred_check_branch
      %38 = sbr.rel (0) target = $region13
    $region12: #{tpu_custom_call.1} parent=1 // pred_region
      _
    $region13: #{tpu_custom_call.1} parent=1 // pred_fallthru
      _
    // Predicated region
    $region14: #{tpu_custom_call.1} parent=1 // pred_check
      _
    $region15: #{tpu_custom_call.1} parent=1 // pred_check_branch
      %40 = sbr.rel (0) target = $region17
    $region16: #{tpu_custom_call.1} parent=1 // pred_region
      _
    $region17: #{tpu_custom_call.1} parent=1 // pred_fallthru
      _
    // Predicated region
    $region18: #{tpu_custom_call.1} parent=1 // pred_check
      _
    $region19: #{tpu_custom_call.1} parent=1 // pred_check_branch
      %42 = sbr.rel (0) target = $region21
    $region20: #{tpu_custom_call.1} parent=1 // pred_region
      %s44 = ssub.s32 2048, 2048
      %45 = vsyncadd [#allocation6], %s44
      %s46 = sshll.u32 [#allocation7], 4
      %s47 = int_to_ptr.vmem [resolvable:$true] %s46
      %52 = dma.hbm_to_vmem [thread:$0]  %s4, 2048, %s47, [#allocation6], 128, 128, 8
    $region21: #{tpu_custom_call.1} parent=1 // pred_fallthru
      _
    // Predicated region
    $region22: #{tpu_custom_call.1} parent=1 // pred_check
      _
    $region23: #{tpu_custom_call.1} parent=1 // pred_check_branch
      %54 = sbr.rel (0) target = $region25
    $region24: #{tpu_custom_call.1} parent=1 // pred_region
      %55 = dma.done [#allocation3], 128
    $region25: #{tpu_custom_call.1} parent=1 // pred_fallthru
      _
    // Predicated region
    $region26: #{tpu_custom_call.1} parent=1 // pred_check
      _
    $region27: #{tpu_custom_call.1} parent=1 // pred_check_branch
      %57 = sbr.rel (0) target = $region29
    $region28: #{tpu_custom_call.1} parent=1 // pred_region
      %58 = dma.done [#allocation6], 128
    $region29: #{tpu_custom_call.1} parent=1 // pred_fallthru
      _
    // Predicated region
    $region30: #{tpu_custom_call.1} parent=1 // pred_check
      _
    $region31: #{tpu_custom_call.1} parent=1 // pred_check_branch
      %60 = sbr.rel (0) target = $region33
    $region32: #{tpu_custom_call.1} parent=1 // pred_region
      %61 = dma.done [#allocation6], 2048
    $region33: #{tpu_custom_call.1} parent=1 // pred_fallthru
      _
    %v62 = vld [vmem:[#allocation2] sm:$0xff]
    %v63 = vld [vmem:[#allocation5] sm:$0xff]
    %v64 = vadd.f32 %v62, %v63
    %v65 = vld [vmem:[#allocation7] sm:$0xff]
    %v66 = vld [vmem:[#allocation7 + $0x8] sm:$0xff]
    %v67 = vld [vmem:[#allocation7 + $0x10] sm:$0xff]
    %v68 = vld [vmem:[#allocation7 + $0x18] sm:$0xff]
    %v69 = vld [vmem:[#allocation7 + $0x20] sm:$0xff]
    %v70 = vld [vmem:[#allocation7 + $0x28] sm:$0xff]
    %v71 = vld [vmem:[#allocation7 + $0x30] sm:$0xff]
    %v72 = vld [vmem:[#allocation7 + $0x38] sm:$0xff]
    %v73 = vld [vmem:[#allocation7 + $0x40] sm:$0xff]
    %v74 = vld [vmem:[#allocation7 + $0x48] sm:$0xff]
    %v75 = vld [vmem:[#allocation7 + $0x50] sm:$0xff]
    %v76 = vld [vmem:[#allocation7 + $0x58] sm:$0xff]
    %v77 = vld [vmem:[#allocation7 + $0x60] sm:$0xff]
    %v78 = vld [vmem:[#allocation7 + $0x68] sm:$0xff]
    %v79 = vld [vmem:[#allocation7 + $0x70] sm:$0xff]
    %v80 = vld [vmem:[#allocation7 + $0x78] sm:$0xff]
    %81 = vmatprep.subr.mxu0 0.0
    %82 = vmatpush1.msra.mxu0 %v65
    %83 = vmatprep.subr.mxu0 0.0
    %84 = vmatpush1.msra.mxu0 %v66
    %85 = vmatprep.subr.mxu0 0.0
    %86 = vmatpush1.msra.mxu0 %v67
    %87 = vmatprep.subr.mxu0 0.0
    %88 = vmatpush1.msra.mxu0 %v68
    %89 = vmatprep.subr.mxu0 0.0
    %90 = vmatpush1.msra.mxu0 %v69
    %91 = vmatprep.subr.mxu0 0.0
    %92 = vmatpush1.msra.mxu0 %v70
    %93 = vmatprep.subr.mxu0 0.0
    %94 = vmatpush1.msra.mxu0 %v71
    %95 = vmatprep.subr.mxu0 0.0
    %96 = vmatpush1.msra.mxu0 %v72
    %97 = vmatprep.subr.mxu0 0.0
    %98 = vmatpush1.msra.mxu0 %v73
    %99 = vmatprep.subr.mxu0 0.0
    %100 = vmatpush1.msra.mxu0 %v74
    %101 = vmatprep.subr.mxu0 0.0
    %102 = vmatpush1.msra.mxu0 %v75
    %103 = vmatprep.subr.mxu0 0.0
    %104 = vmatpush1.msra.mxu0 %v76
    %105 = vmatprep.subr.mxu0 0.0
    %106 = vmatpush1.msra.mxu0 %v77
    %107 = vmatprep.subr.mxu0 0.0
    %108 = vmatpush1.msra.mxu0 %v78
    %109 = vmatprep.subr.mxu0 0.0
    %110 = vmatpush1.msra.mxu0 %v79
    %111 = vmatprep.subr.mxu0 0.0
    %112 = vmatpush1.msra.mxu0 %v80
    %113 = vmatprep.subr.mxu0 0.0
    %114 = vmatpush1.msra.mxu0 0.0
    %115 = vmatprep.subr.mxu0 0.0
    %116 = vmatpush1.msra.mxu0 0.0
    %117 = vmatprep.subr.mxu0 0.0
    %118 = vmatpush1.msra.mxu0 0.0
    %119 = vmatprep.subr.mxu0 0.0
    %120 = vmatpush1.msra.mxu0 0.0
    %121 = vmatprep.subr.mxu0 0.0
    %122 = vmatpush1.msra.mxu0 0.0
    %123 = vmatprep.subr.mxu0 0.0
    %124 = vmatpush1.msra.mxu0 0.0
    %125 = vmatprep.subr.mxu0 0.0
    %126 = vmatpush1.msra.mxu0 0.0
    %127 = vmatprep.subr.mxu0 0.0
    %128 = vmatpush1.msra.mxu0 0.0
    %129 = vmatprep.subr.mxu0 0.0
    %130 = vmatpush1.msra.mxu0 0.0
    %131 = vmatprep.subr.mxu0 0.0
    %132 = vmatpush1.msra.mxu0 0.0
    %133 = vmatprep.subr.mxu0 0.0
    %134 = vmatpush1.msra.mxu0 0.0
    %135 = vmatprep.subr.mxu0 0.0
    %136 = vmatpush1.msra.mxu0 0.0
    %137 = vmatprep.subr.mxu0 0.0
    %138 = vmatpush1.msra.mxu0 0.0
    %139 = vmatprep.subr.mxu0 0.0
    %140 = vmatpush1.msra.mxu0 0.0
    %141 = vmatprep.subr.mxu0 0.0
    %142 = vmatpush1.msra.mxu0 0.0
    %143 = vmatprep.subr.mxu0 0.0
    %144 = vmatpush1.msra.mxu0 0.0
    %145 = vmatprep.mubr.f32.mxu0 0.0
    %146 = vmatmul.mubr.f32.gmra.mrb[0].mxu0 %v64
    %v147 = vpop.f32.mrb[0].mxu0
    %v148 = vadd.f32 0.0, %v147
    %v149 = vpop.f32.mrb[0].mxu0
    %150 = vdwg.mxu0
    %v151 = vsub.f32 %v64, %v148
    %v152 = vmul.f32 %v151, %v151
    %153 = vmatprep.subr.mxu0 0.0
    %154 = vmatpush1.msra.mxu0 %v65
    %155 = vmatprep.subr.mxu0 0.0
    %156 = vmatpush1.msra.mxu0 %v66
    %157 = vmatprep.subr.mxu0 0.0
    %158 = vmatpush1.msra.mxu0 %v67
    %159 = vmatprep.subr.mxu0 0.0
    %160 = vmatpush1.msra.mxu0 %v68
    %161 = vmatprep.subr.mxu0 0.0
    %162 = vmatpush1.msra.mxu0 %v69
    %163 = vmatprep.subr.mxu0 0.0
    %164 = vmatpush1.msra.mxu0 %v70
    %165 = vmatprep.subr.mxu0 0.0
    %166 = vmatpush1.msra.mxu0 %v71
    %167 = vmatprep.subr.mxu0 0.0
    %168 = vmatpush1.msra.mxu0 %v72
    %169 = vmatprep.subr.mxu0 0.0
    %170 = vmatpush1.msra.mxu0 %v73
    %171 = vmatprep.subr.mxu0 0.0
    %172 = vmatpush1.msra.mxu0 %v74
    %173 = vmatprep.subr.mxu0 0.0
    %174 = vmatpush1.msra.mxu0 %v75
    %175 = vmatprep.subr.mxu0 0.0
    %176 = vmatpush1.msra.mxu0 %v76
    %177 = vmatprep.subr.mxu0 0.0
    %178 = vmatpush1.msra.mxu0 %v77
    %179 = vmatprep.subr.mxu0 0.0
    %180 = vmatpush1.msra.mxu0 %v78
    %181 = vmatprep.subr.mxu0 0.0
    %182 = vmatpush1.msra.mxu0 %v79
    %183 = vmatprep.subr.mxu0 0.0
    %184 = vmatpush1.msra.mxu0 %v80
    %185 = vmatprep.subr.mxu0 0.0
    %186 = vmatpush1.msra.mxu0 0.0
    %187 = vmatprep.subr.mxu0 0.0
    %188 = vmatpush1.msra.mxu0 0.0
    %189 = vmatprep.subr.mxu0 0.0
    %190 = vmatpush1.msra.mxu0 0.0
    %191 = vmatprep.subr.mxu0 0.0
    %192 = vmatpush1.msra.mxu0 0.0
    %193 = vmatprep.subr.mxu0 0.0
    %194 = vmatpush1.msra.mxu0 0.0
    %195 = vmatprep.subr.mxu0 0.0
    %196 = vmatpush1.msra.mxu0 0.0
    %197 = vmatprep.subr.mxu0 0.0
    %198 = vmatpush1.msra.mxu0 0.0
    %199 = vmatprep.subr.mxu0 0.0
    %200 = vmatpush1.msra.mxu0 0.0
    %201 = vmatprep.subr.mxu0 0.0
    %202 = vmatpush1.msra.mxu0 0.0
    %203 = vmatprep.subr.mxu0 0.0
    %204 = vmatpush1.msra.mxu0 0.0
    %205 = vmatprep.subr.mxu0 0.0
    %206 = vmatpush1.msra.mxu0 0.0
    %207 = vmatprep.subr.mxu0 0.0
    %208 = vmatpush1.msra.mxu0 0.0
    %209 = vmatprep.subr.mxu0 0.0
    %210 = vmatpush1.msra.mxu0 0.0
    %211 = vmatprep.subr.mxu0 0.0
    %212 = vmatpush1.msra.mxu0 0.0
    %213 = vmatprep.subr.mxu0 0.0
    %214 = vmatpush1.msra.mxu0 0.0
    %215 = vmatprep.subr.mxu0 0.0
    %216 = vmatpush1.msra.mxu0 0.0
    %217 = vmatprep.mubr.f32.mxu0 0.0
    %218 = vmatmul.mubr.f32.gmra.mrb[0].mxu0 %v152
    %v219 = vpop.f32.mrb[0].mxu0
    %v220 = vadd.f32 1e-05, %v219
    %v221 = vpop.f32.mrb[0].mxu0
    %222 = vdwg.mxu0
    %v223 = vrsqrt.pop %v220
    %v224 = vmul.f32 %v151, %v223
    %v225 = vld [vmem:[%s2] sm:$0x1]
    %v227 = vlaneseq
    %v228 = vshrl.u32 %v227, 7
    %v229 = vsub.s32 0, %v228
    %v230 = vrot.slane %v225, %v229
    %v232 = vmul.f32 %v224, %v230
    %v233 = vld [vmem:[%s3] sm:$0x1]
    %v235 = vlaneseq
    %v236 = vshrl.u32 %v235, 7
    %v237 = vsub.s32 0, %v236
    %v238 = vrot.slane %v233, %v237
    %v240 = vadd.f32 %v232, %v238
    %241 = vst [vmem:[#allocation8] sm:$0xff] %v240
    // Predicated region
    $region34: #{tpu_custom_call.1} parent=1 // pred_check
      _
    $region35: #{tpu_custom_call.1} parent=1 // pred_check_branch
      %243 = sbr.rel (0) target = $region37
    $region36: #{tpu_custom_call.1} parent=1 // pred_region
      %s245 = ssub.s32 128, 64
      %246 = vsyncadd [#allocation4], %s245
      %s247 = sshll.u32 [#allocation8], 4
      %s248 = int_to_ptr.vmem [resolvable:$true] %s247
      %253 = dma.vmem_to_hbm [thread:$0]  %s248, 64, %s5, [#allocation4], 64, 64, 4
    $region37: #{tpu_custom_call.1} parent=1 // pred_fallthru
      _
    // Predicated region
    $region38: #{tpu_custom_call.1} parent=1 // pred_check
      _
    $region39: #{tpu_custom_call.1} parent=1 // pred_check_branch
      %255 = sbr.rel (0) target = $region41
    $region40: #{tpu_custom_call.1} parent=1 // pred_region
      %256 = dma.done [#allocation4], 128
    $region41: #{tpu_custom_call.1} parent=1 // pred_fallthru
      _
    %257 = vsyncpa [#allocation3], 1
    %258 = vsyncpa [#allocation6], 1
    %259 = vsyncpa [#allocation4], 1

</llo_original>
